<compile_context>
chip_gen: v7x
topology: tpu7x:2x2x1
jax: 0.10.0
libtpu: 0.0.40
codegen_flags: <defaults>
</compile_context>

<pallas_src>
import functools

import jax
import jax.numpy as jnp
from jax.experimental import pallas as pl
from jax.experimental.pallas import tpu as pltpu

_LANES = 128
_SUBLANES = 8  # f32 sublane granularity


def _cdiv(a, b):
    return -(-a // b)


def _round_up(n, m):
    return ((n + m - 1) // m) * m


def policy_net_kernel(x_ref, w1_ref, b1_ref, w2_ref, b2_ref, out_ref):
    # x arrives as f32 (single HBM pass); cast to bf16 in-register for the MXU.
    xb = x_ref[...].astype(jnp.bfloat16)

    # fc1 + ReLU: bf16 MXU matmul, f32 accumulate, f32 epilogue.
    h = jnp.dot(xb, w1_ref[...], preferred_element_type=jnp.float32)
    h = jnp.maximum(h + b1_ref[...], 0.0)            # b1 is (1, H), broadcasts

    # fc2 into a lane-dense (TB, 128) slab. Padded lanes carry a -1e30 f32 bias
    # so exp() underflows to exactly 0 and they drop out of the softmax sum.
    logits = jnp.dot(h.astype(jnp.bfloat16), w2_ref[...],
                     preferred_element_type=jnp.float32)
    logits = logits + b2_ref[...]                     # b2 is (1, 128), f32

    # Numerically stable softmax over the action (lane) axis.
    # Exact division (not approx reciprocal) so each row sums to 1.
    m = jnp.max(logits, axis=-1, keepdims=True)
    e = jnp.exp(logits - m)
    denom = jnp.sum(e, axis=-1, keepdims=True)
    out_ref[...] = (e / denom).astype(out_ref.dtype)


@functools.partial(jax.jit, static_argnames=("block_b",))
def policy_network_probs_padded(x, w1, b1, w2, b2, *, block_b=1024):
    """Core kernel: (B, S) f32 -> lane-dense (B_pad, 128) f32 probs slab.

    Rows [B:] and lanes [A:] are padding; perf-sensitive consumers should use
    this slab directly (or fuse their own slice) instead of materializing a
    sliced copy.
    """
    B, S = x.shape
    H = w1.shape[1]
    A = w2.shape[1]
    assert A <= _LANES, "action_size > 128 would need extra lane tiles"

    # ---- wrapper-side layout plumbing (parameter-sized only) ----------------
    # Lane-dense fc2 params: (H, 128) bf16 weights (zero pad), (1, 128) f32
    # bias with -1e30 in padded lanes (MUST stay f32: -1e30 -> bf16 is -inf).
    w2p = jnp.zeros((H, _LANES), jnp.float32).at[:, :A].set(w2.astype(jnp.float32))
    b2p = jnp.full((1, _LANES), -1e30, jnp.float32).at[:, :A].set(
        b2.astype(jnp.float32))
    w1b = w1.astype(jnp.bfloat16)
    w2b = w2p.astype(jnp.bfloat16)
    b1f = b1.astype(jnp.float32)

    # Balanced batch tiling: n_steps tiles of TB rows; padding < 8 * n_steps
    # rows.  Small B => a single grid step.
    n_steps = _cdiv(B, block_b)
    TB = _round_up(_cdiv(B, n_steps), _SUBLANES)
    B_pad = n_steps * TB

    xf = x.astype(jnp.float32)
    if B_pad != B:
        xf = jnp.pad(xf, ((0, B_pad - B), (0, 0)))

    return pl.pallas_call(
        policy_net_kernel,
        out_shape=jax.ShapeDtypeStruct((B_pad, _LANES), jnp.float32),
        grid_spec=pltpu.PrefetchScalarGridSpec(
            num_scalar_prefetch=0,
            grid=(n_steps,),
            in_specs=[
                pl.BlockSpec((TB, S), lambda i: (i, 0)),       # streamed x (f32)
                pl.BlockSpec((S, H), lambda i: (0, 0)),        # resident W1
                pl.BlockSpec((1, H), lambda i: (0, 0)),        # resident b1
                pl.BlockSpec((H, _LANES), lambda i: (0, 0)),   # resident W2 (padded)
                pl.BlockSpec((1, _LANES), lambda i: (0, 0)),   # resident b2 (padded)
            ],
            out_specs=pl.BlockSpec((TB, _LANES), lambda i: (i, 0)),
        ),
        compiler_params=pltpu.CompilerParams(
            dimension_semantics=("parallel",)),  # shards steps across 2 TCs on v7x
    )(xf, w1b, b1f, w2b, b2p)


def policy_network_forward(x, w1, b1, w2, b2, *, block_b=1024):
    """Module-shaped forward: (B, S) -> (B, A) softmax probs.

    The slice here is consumer-side layout plumbing; jit around this wrapper
    (or consume the padded slab directly) to avoid a separate slice copy.
    """
    B = x.shape[0]
    A = w2.shape[1]
    out = policy_network_probs_padded(x, w1, b1, w2, b2, block_b=block_b)
    return out[:B, :A]


if __name__ == "__main__":
    # Small shapes consistent with the module: state_size=8, hidden=64, action_size=4.
    batch, state_size, hidden_size, action_size = 200, 8, 64, 4

    key = jax.random.PRNGKey(0)
    k_x, k_w1, k_b1, k_w2, k_b2 = jax.random.split(key, 5)

    # Deterministic synthetic parameters (uniform, like nn.Linear default scale).
    lim1 = 1.0 / (state_size ** 0.5)
    lim2 = 1.0 / (hidden_size ** 0.5)
    w1 = jax.random.uniform(k_w1, (state_size, hidden_size), jnp.float32, -lim1, lim1)
    b1 = jax.random.uniform(k_b1, (1, hidden_size), jnp.float32, -lim1, lim1)
    w2 = jax.random.uniform(k_w2, (hidden_size, action_size), jnp.float32, -lim2, lim2)
    b2 = jax.random.uniform(k_b2, (1, action_size), jnp.float32, -lim2, lim2)

    x = jax.random.normal(k_x, (batch, state_size), jnp.float32)

    # Reference in plain f32 JAX (same math path as the PyTorch module).
    h_ref = jnp.maximum(x @ w1 + b1, 0.0)
    ref = jax.nn.softmax(h_ref @ w2 + b2, axis=-1)

    # Single-step path (default block_b=1024): no batch padding at B=200.
    probs = jax.block_until_ready(policy_network_forward(x, w1, b1, w2, b2))
    assert probs.shape == (batch, action_size)
    # bf16 matmul inputs -> loosen f32 tolerance slightly.
    assert jnp.allclose(probs, ref, atol=2e-2), "single-step mismatch vs reference"
    assert jnp.allclose(jnp.sum(probs, axis=-1), 1.0, atol=1e-4)

    # Multi-step path (block_b=128 -> 2 grid steps, padded tail): exercises the
    # pipelined, batch-padded path.
    probs2 = jax.block_until_ready(
        policy_network_forward(x, w1, b1, w2, b2, block_b=128))
    assert probs2.shape == (batch, action_size)
    assert jnp.allclose(probs2, ref, atol=2e-2), "multi-step mismatch vs reference"
    assert jnp.allclose(jnp.sum(probs2, axis=-1), 1.0, atol=1e-4)

    print("KERNEL_OK")
</pallas_src>

<mosaic_0001>
module attributes {stable_mosaic.version = 11 : i64} {
  func.func @policy_net_kernel(%arg0: i32, %arg1: memref<200x8xf32, #tpu.memory_space<vmem>>, %arg2: memref<8x64xbf16, #tpu.memory_space<vmem>>, %arg3: memref<1x64xf32, #tpu.memory_space<vmem>>, %arg4: memref<64x128xbf16, #tpu.memory_space<vmem>>, %arg5: memref<1x128xf32, #tpu.memory_space<vmem>>, %arg6: memref<200x128xf32, #tpu.memory_space<vmem>>) attributes {dimension_semantics = [#tpu.dimension_semantics<parallel>], iteration_bounds = array<i64: 1>, scalar_prefetch = 0 : i64, scratch_operands = 0 : i64, tpu.core_type = #tpu.core_type<tc>, window_params = [{transform_indices = @transform_0, window_bounds = array<i64: 200, 8>}, {pipeline_mode = #tpu.pipeline_mode<synchronous>, transform_indices = @transform_1, window_bounds = array<i64: 8, 64>}, {pipeline_mode = #tpu.pipeline_mode<synchronous>, transform_indices = @transform_2, window_bounds = array<i64: 1, 64>}, {pipeline_mode = #tpu.pipeline_mode<synchronous>, transform_indices = @transform_3, window_bounds = array<i64: 64, 128>}, {pipeline_mode = #tpu.pipeline_mode<synchronous>, transform_indices = @transform_4, window_bounds = array<i64: 1, 128>}, {transform_indices = @transform_5, window_bounds = array<i64: 200, 128>}]} {
    %c0 = arith.constant 0 : index
    %c0_0 = arith.constant 0 : index
    %0 = vector.load %arg1[%c0, %c0_0] : memref<200x8xf32, #tpu.memory_space<vmem>>, vector<200x8xf32>
    %1 = arith.truncf %0 : vector<200x8xf32> to vector<200x8xbf16>
    %c0_1 = arith.constant 0 : index
    %c0_2 = arith.constant 0 : index
    %2 = vector.load %arg2[%c0_1, %c0_2] : memref<8x64xbf16, #tpu.memory_space<vmem>>, vector<8x64xbf16>
    %cst = arith.constant dense<0.000000e+00> : vector<200x64xf32>
    %3 = tpu.matmul %1, %2, %cst {dimension_numbers = #tpu.dot_dimension_numbers<[1], [0], [0], [1], [0, 0, 1, 1], [], []>} : vector<200x8xbf16>, vector<8x64xbf16>, vector<200x64xf32> -> vector<200x64xf32>
    %c0_3 = arith.constant 0 : index
    %c0_4 = arith.constant 0 : index
    %4 = vector.load %arg3[%c0_3, %c0_4] : memref<1x64xf32, #tpu.memory_space<vmem>>, vector<1x64xf32>
    %5 = vector.broadcast %4 : vector<1x64xf32> to vector<200x64xf32>
    %6 = arith.addf %3, %5 : vector<200x64xf32>
    %cst_5 = arith.constant 0.000000e+00 : f32
    %7 = vector.broadcast %cst_5 : f32 to vector<200x64xf32>
    %8 = arith.maximumf %6, %7 : vector<200x64xf32>
    %9 = arith.truncf %8 : vector<200x64xf32> to vector<200x64xbf16>
    %c0_6 = arith.constant 0 : index
    %c0_7 = arith.constant 0 : index
    %10 = vector.load %arg4[%c0_6, %c0_7] : memref<64x128xbf16, #tpu.memory_space<vmem>>, vector<64x128xbf16>
    %cst_8 = arith.constant dense<0.000000e+00> : vector<200x128xf32>
    %11 = tpu.matmul %9, %10, %cst_8 {dimension_numbers = #tpu.dot_dimension_numbers<[1], [0], [0], [1], [0, 0, 1, 1], [], []>} : vector<200x64xbf16>, vector<64x128xbf16>, vector<200x128xf32> -> vector<200x128xf32>
    %c0_9 = arith.constant 0 : index
    %c0_10 = arith.constant 0 : index
    %12 = vector.load %arg5[%c0_9, %c0_10] : memref<1x128xf32, #tpu.memory_space<vmem>>, vector<1x128xf32>
    %13 = vector.broadcast %12 : vector<1x128xf32> to vector<200x128xf32>
    %14 = arith.addf %11, %13 : vector<200x128xf32>
    %cst_11 = arith.constant dense<0xFF800000> : vector<200xf32>
    %15 = vector.multi_reduction <maximumf>, %14, %cst_11 [1] : vector<200x128xf32> to vector<200xf32>
    %16 = vector.shape_cast %15 : vector<200xf32> to vector<200x1xf32>
    %17 = vector.broadcast %16 : vector<200x1xf32> to vector<200x128xf32>
    %18 = arith.subf %14, %17 : vector<200x128xf32>
    %19 = math.exp %18 : vector<200x128xf32>
    %cst_12 = arith.constant dense<0.000000e+00> : vector<200xf32>
    %20 = vector.multi_reduction <add>, %19, %cst_12 [1] : vector<200x128xf32> to vector<200xf32>
    %21 = vector.shape_cast %20 : vector<200xf32> to vector<200x1xf32>
    %22 = vector.broadcast %21 : vector<200x1xf32> to vector<200x128xf32>
    %23 = arith.divf %19, %22 : vector<200x128xf32>
    %c0_13 = arith.constant 0 : index
    %c0_14 = arith.constant 0 : index
    %24 = vector.load %arg6[%c0_13, %c0_14] : memref<200x128xf32, #tpu.memory_space<vmem>>, vector<200x128xf32>
    tpu.vector_store %arg6[%c0_13, %c0_14], %23 {strides = array<i32>} : memref<200x128xf32, #tpu.memory_space<vmem>>, vector<200x128xf32>,
    return
  }
  func.func @transform_0(%arg0: i32) -> (i32, i32) {
    %c0_i32 = arith.constant 0 : i32
    %c0_i32_0 = arith.constant 0 : i32
    return %arg0, %c0_i32 : i32, i32
  }
  func.func @transform_1(%arg0: i32) -> (i32, i32) {
    %c0_i32 = arith.constant 0 : i32
    %c0_i32_0 = arith.constant 0 : i32
    %c0_i32_1 = arith.constant 0 : i32
    return %c0_i32, %c0_i32_0 : i32, i32
  }
  func.func @transform_2(%arg0: i32) -> (i32, i32) {
    %c0_i32 = arith.constant 0 : i32
    %c0_i32_0 = arith.constant 0 : i32
    %c0_i32_1 = arith.constant 0 : i32
    return %c0_i32, %c0_i32_0 : i32, i32
  }
  func.func @transform_3(%arg0: i32) -> (i32, i32) {
    %c0_i32 = arith.constant 0 : i32
    %c0_i32_0 = arith.constant 0 : i32
    %c0_i32_1 = arith.constant 0 : i32
    return %c0_i32, %c0_i32_0 : i32, i32
  }
  func.func @transform_4(%arg0: i32) -> (i32, i32) {
    %c0_i32 = arith.constant 0 : i32
    %c0_i32_0 = arith.constant 0 : i32
    %c0_i32_1 = arith.constant 0 : i32
    return %c0_i32, %c0_i32_0 : i32, i32
  }
  func.func @transform_5(%arg0: i32) -> (i32, i32) {
    %c0_i32 = arith.constant 0 : i32
    %c0_i32_0 = arith.constant 0 : i32
    return %arg0, %c0_i32 : i32, i32
  }
}

</mosaic_0001>

<llo_original>
// kernel: policy_network_probs_padded.1
$region0: #{policy_network_probs_padded.1}
  #allocation0 [shape = 'u32[]', space=smem, size = 0x4, offset = 0x4, fixed_abs, tag = 'smem constant byte address 0x4 - core index']
  #allocation1 [shape = 'u32[144,128]{1,0:T(1,128)}', space=vmem, size = 0x12000, scoped, tag = 'internal scratch']
  %s0 = inlined_call_operand.vmem [shape: f32[200,8], index: 0, kind: input, shape index: {}]
  %s1 = inlined_call_operand.vmem [shape: bf16[8,64], index: 1, kind: input, shape index: {}]
  %s2 = inlined_call_operand.vmem [shape: f32[1,64], index: 2, kind: input, shape index: {}]
  %s3 = inlined_call_operand.vmem [shape: bf16[64,128], index: 3, kind: input, shape index: {}]
  %s4 = inlined_call_operand.vmem [shape: f32[1,128], index: 4, kind: input, shape index: {}]
  %s5 = inlined_call_operand.hbm [shape: f32[200,128], index: 5, kind: output, shape index: {}]
  %s6 = sld [smem:[#allocation0]]
  $region30: #{policy_network_probs_padded.1} parent=0
    _
  %s8 = ssub.s32 1, %s6
  %s9 = scalar_select 0, %s8, %s6
  $region1: #{policy_network_probs_padded.1} parent=0
    #allocation2 [shape = 'u8[102400]{0}', space=vmem, size = 0x19000, scoped, tag = 'output window, operand 0, single buffered']
    #allocation3 [shape = 's32[1]{0}', space=sflag, size = 0x4, scoped, tag = 'scoped memory for policy_network_probs_padded.1']
    %10 = vsyncpa [#allocation3], 0
    // Predicated region
    $region2: #{policy_network_probs_padded.1} parent=1 // pred_check
      _
    $region3: #{policy_network_probs_padded.1} parent=1 // pred_check_branch
      %12 = sbr.rel (0) target = $region5
    $region4: #{policy_network_probs_padded.1} parent=1 // pred_region
      _
    $region5: #{policy_network_probs_padded.1} parent=1 // pred_fallthru
      _
    // Predicated region
    $region6: #{policy_network_probs_padded.1} parent=1 // pred_check
      _
    $region7: #{policy_network_probs_padded.1} parent=1 // pred_check_branch
      %14 = sbr.rel (0) target = $region9
    $region8: #{policy_network_probs_padded.1} parent=1 // pred_region
      _
    $region9: #{policy_network_probs_padded.1} parent=1 // pred_fallthru
      _
    // Predicated region
    $region10: #{policy_network_probs_padded.1} parent=1 // pred_check
      _
    $region11: #{policy_network_probs_padded.1} parent=1 // pred_check_branch
      %16 = sbr.rel (0) target = $region13
    $region12: #{policy_network_probs_padded.1} parent=1 // pred_region
      _
    $region13: #{policy_network_probs_padded.1} parent=1 // pred_fallthru
      _
    // Predicated region
    $region14: #{policy_network_probs_padded.1} parent=1 // pred_check
      _
    $region15: #{policy_network_probs_padded.1} parent=1 // pred_check_branch
      %18 = sbr.rel (0) target = $region17
    $region16: #{policy_network_probs_padded.1} parent=1 // pred_region
      _
    $region17: #{policy_network_probs_padded.1} parent=1 // pred_fallthru
      _
    // Predicated region
    $region18: #{policy_network_probs_padded.1} parent=1 // pred_check
      _
    $region19: #{policy_network_probs_padded.1} parent=1 // pred_check_branch
      %20 = sbr.rel (0) target = $region21
    $region20: #{policy_network_probs_padded.1} parent=1 // pred_region
      _
    $region21: #{policy_network_probs_padded.1} parent=1 // pred_fallthru
      _
    %v22 = vld [vmem:[%s0] sm:$0xff]
    %v23 = vld [vmem:[%s0 + $0x8] sm:$0xff]
    %v24 = vld [vmem:[%s0 + $0x10] sm:$0xff]
    %v25 = vld [vmem:[%s0 + $0x18] sm:$0xff]
    %v26 = vld [vmem:[%s0 + $0x20] sm:$0xff]
    %v27 = vld [vmem:[%s0 + $0x28] sm:$0xff]
    %v28 = vld [vmem:[%s0 + $0x30] sm:$0xff]
    %v29 = vld [vmem:[%s0 + $0x38] sm:$0xff]
    %v30 = vld [vmem:[%s0 + $0x40] sm:$0xff]
    %v31 = vld [vmem:[%s0 + $0x48] sm:$0xff]
    %v32 = vld [vmem:[%s0 + $0x50] sm:$0xff]
    %v33 = vld [vmem:[%s0 + $0x58] sm:$0xff]
    %v34 = vld [vmem:[%s0 + $0x60] sm:$0xff]
    %v35 = vld [vmem:[%s0 + $0x68] sm:$0xff]
    %v36 = vld [vmem:[%s0 + $0x70] sm:$0xff]
    %v37 = vld [vmem:[%s0 + $0x78] sm:$0xff]
    %v38 = vld [vmem:[%s0 + $0x80] sm:$0xff]
    %v39 = vld [vmem:[%s0 + $0x88] sm:$0xff]
    %v40 = vld [vmem:[%s0 + $0x90] sm:$0xff]
    %v41 = vld [vmem:[%s0 + $0x98] sm:$0xff]
    %v42 = vld [vmem:[%s0 + $0xa0] sm:$0xff]
    %v43 = vld [vmem:[%s0 + $0xa8] sm:$0xff]
    %v44 = vld [vmem:[%s0 + $0xb0] sm:$0xff]
    %v45 = vld [vmem:[%s0 + $0xb8] sm:$0xff]
    %v46 = vld [vmem:[%s0 + $0xc0] sm:$0xff]
    %v47 = vpack.c.bf16 %v23, %v22
    %v48 = vpack.c.bf16 %v25, %v24
    %v49 = vpack.c.bf16 %v27, %v26
    %v50 = vpack.c.bf16 %v29, %v28
    %v51 = vpack.c.bf16 %v31, %v30
    %v52 = vpack.c.bf16 %v33, %v32
    %v53 = vpack.c.bf16 %v35, %v34
    %v54 = vpack.c.bf16 %v37, %v36
    %v55 = vpack.c.bf16 %v39, %v38
    %v56 = vpack.c.bf16 %v41, %v40
    %v57 = vpack.c.bf16 %v43, %v42
    %v58 = vpack.c.bf16 %v45, %v44
    %v59 = vpack.c.bf16 %v46, %v46
    %v60 = vld [vmem:[%s1] sm:$0xf]
    %v61 = vld [vmem:[%s2] sm:$0x1]
    %v63 = vlaneseq
    %v64 = vshrl.u32 %v63, 7
    %v65 = vsub.s32 0, %v64
    %v66 = vrot.slane %v61, %v65
    %vm68 = vcmask 64512
    %v70 = vsel %vm68, %v47, 0
    %v73 = vsel %vm68, %v48, 0
    %v76 = vsel %vm68, %v49, 0
    %v79 = vsel %vm68, %v50, 0
    %v82 = vsel %vm68, %v51, 0
    %v85 = vsel %vm68, %v52, 0
    %v88 = vsel %vm68, %v53, 0
    %v91 = vsel %vm68, %v54, 0
    %v94 = vsel %vm68, %v55, 0
    %v97 = vsel %vm68, %v56, 0
    %v100 = vsel %vm68, %v57, 0
    %v103 = vsel %vm68, %v58, 0
    %v106 = vsel %vm68, %v59, 0
    %vm108 = vcmask 1043456
    %v110 = vsel %vm108, %v60, 0
    %112 = vmatprep.subr.bf16.mxu0 0
    %113 = vmatpush1.bf16.msra.mxu0 %v110
    %114 = vmatprep.subr.bf16.mxu0 0
    %115 = vmatpush1.bf16.msra.mxu0 0
    %116 = vmatprep.subr.bf16.mxu0 0
    %117 = vmatpush1.bf16.msra.mxu0 0
    %118 = vmatprep.subr.bf16.mxu0 0
    %119 = vmatpush1.bf16.msra.mxu0 0
    %120 = vmatprep.subr.bf16.mxu0 0
    %121 = vmatpush1.bf16.msra.mxu0 0
    %122 = vmatprep.subr.bf16.mxu0 0
    %123 = vmatpush1.bf16.msra.mxu0 0
    %124 = vmatprep.subr.bf16.mxu0 0
    %125 = vmatpush1.bf16.msra.mxu0 0
    %126 = vmatprep.subr.bf16.mxu0 0
    %127 = vmatpush1.bf16.msra.mxu0 0
    %128 = vmatprep.subr.bf16.mxu0 0
    %129 = vmatpush1.bf16.msra.mxu0 0
    %130 = vmatprep.subr.bf16.mxu0 0
    %131 = vmatpush1.bf16.msra.mxu0 0
    %132 = vmatprep.subr.bf16.mxu0 0
    %133 = vmatpush1.bf16.msra.mxu0 0
    %134 = vmatprep.subr.bf16.mxu0 0
    %135 = vmatpush1.bf16.msra.mxu0 0
    %136 = vmatprep.subr.bf16.mxu0 0
    %137 = vmatpush1.bf16.msra.mxu0 0
    %138 = vmatprep.subr.bf16.mxu0 0
    %139 = vmatpush1.bf16.msra.mxu0 0
    %140 = vmatprep.subr.bf16.mxu0 0
    %141 = vmatpush1.bf16.msra.mxu0 0
    %142 = vmatprep.subr.bf16.mxu0 0
    %143 = vmatpush1.bf16.msra.mxu0 0
    %144 = vmatprep.mubr.bf16.mxu0 0
    %145 = vmatmul.mubr.bf16.gmra.mrb[0].mxu0 %v70
    %v146 = vpop.f32.mrb[0].mxu0
    %v147 = vadd.f32 %v66, %v146
    %v148 = vpop.f32.mrb[0].mxu0
    %v149 = vpop.f32.mrb[0].mxu0
    %v150 = vadd.f32 %v66, %v149
    %v151 = vpop.f32.mrb[0].mxu0
    %152 = vmatprep.mubr.bf16.mxu0 0
    %153 = vmatmul.mubr.bf16.gmra.mrb[0].mxu0 %v73
    %v154 = vpop.f32.mrb[0].mxu0
    %v155 = vadd.f32 %v66, %v154
    %v156 = vpop.f32.mrb[0].mxu0
    %v157 = vpop.f32.mrb[0].mxu0
    %v158 = vadd.f32 %v66, %v157
    %v159 = vpop.f32.mrb[0].mxu0
    %160 = vmatprep.mubr.bf16.mxu0 0
    %161 = vmatmul.mubr.bf16.gmra.mrb[0].mxu0 %v76
    %v162 = vpop.f32.mrb[0].mxu0
    %v163 = vadd.f32 %v66, %v162
    %v164 = vpop.f32.mrb[0].mxu0
    %v165 = vpop.f32.mrb[0].mxu0
    %v166 = vadd.f32 %v66, %v165
    %v167 = vpop.f32.mrb[0].mxu0
    %168 = vmatprep.mubr.bf16.mxu0 0
    %169 = vmatmul.mubr.bf16.gmra.mrb[0].mxu0 %v79
    %v170 = vpop.f32.mrb[0].mxu0
    %v171 = vadd.f32 %v66, %v170
    %v172 = vpop.f32.mrb[0].mxu0
    %v173 = vpop.f32.mrb[0].mxu0
    %v174 = vadd.f32 %v66, %v173
    %v175 = vpop.f32.mrb[0].mxu0
    %176 = vmatprep.mubr.bf16.mxu0 0
    %177 = vmatmul.mubr.bf16.gmra.mrb[0].mxu0 %v82
    %v178 = vpop.f32.mrb[0].mxu0
    %v179 = vadd.f32 %v66, %v178
    %v180 = vpop.f32.mrb[0].mxu0
    %v181 = vpop.f32.mrb[0].mxu0
    %v182 = vadd.f32 %v66, %v181
    %v183 = vpop.f32.mrb[0].mxu0
    %184 = vmatprep.mubr.bf16.mxu0 0
    %185 = vmatmul.mubr.bf16.gmra.mrb[0].mxu0 %v85
    %v186 = vpop.f32.mrb[0].mxu0
    %v187 = vadd.f32 %v66, %v186
    %v188 = vpop.f32.mrb[0].mxu0
    %v189 = vpop.f32.mrb[0].mxu0
    %v190 = vadd.f32 %v66, %v189
    %v191 = vpop.f32.mrb[0].mxu0
    %192 = vmatprep.mubr.bf16.mxu0 0
    %193 = vmatmul.mubr.bf16.gmra.mrb[0].mxu0 %v88
    %v194 = vpop.f32.mrb[0].mxu0
    %v195 = vadd.f32 %v66, %v194
    %v196 = vpop.f32.mrb[0].mxu0
    %v197 = vpop.f32.mrb[0].mxu0
    %v198 = vadd.f32 %v66, %v197
    %v199 = vpop.f32.mrb[0].mxu0
    %200 = vmatprep.mubr.bf16.mxu0 0
    %201 = vmatmul.mubr.bf16.gmra.mrb[0].mxu0 %v91
    %v202 = vpop.f32.mrb[0].mxu0
    %v203 = vadd.f32 %v66, %v202
    %v204 = vpop.f32.mrb[0].mxu0
    %v205 = vpop.f32.mrb[0].mxu0
    %v206 = vadd.f32 %v66, %v205
    %v207 = vpop.f32.mrb[0].mxu0
    %208 = vmatprep.mubr.bf16.mxu0 0
    %209 = vmatmul.mubr.bf16.gmra.mrb[0].mxu0 %v94
    %v210 = vpop.f32.mrb[0].mxu0
    %v211 = vadd.f32 %v66, %v210
    %v212 = vpop.f32.mrb[0].mxu0
    %v213 = vpop.f32.mrb[0].mxu0
    %v214 = vadd.f32 %v66, %v213
    %v215 = vpop.f32.mrb[0].mxu0
    %216 = vmatprep.mubr.bf16.mxu0 0
    %217 = vmatmul.mubr.bf16.gmra.mrb[0].mxu0 %v97
    %v218 = vpop.f32.mrb[0].mxu0
    %v219 = vadd.f32 %v66, %v218
    %v220 = vpop.f32.mrb[0].mxu0
    %v221 = vpop.f32.mrb[0].mxu0
    %v222 = vadd.f32 %v66, %v221
    %v223 = vpop.f32.mrb[0].mxu0
    %224 = vmatprep.mubr.bf16.mxu0 0
    %225 = vmatmul.mubr.bf16.gmra.mrb[0].mxu0 %v100
    %v226 = vpop.f32.mrb[0].mxu0
    %v227 = vadd.f32 %v66, %v226
    %v228 = vpop.f32.mrb[0].mxu0
    %v229 = vpop.f32.mrb[0].mxu0
    %v230 = vadd.f32 %v66, %v229
    %v231 = vpop.f32.mrb[0].mxu0
    %232 = vmatprep.mubr.bf16.mxu0 0
    %233 = vmatmul.mubr.bf16.gmra.mrb[0].mxu0 %v103
    %v234 = vpop.f32.mrb[0].mxu0
    %v235 = vadd.f32 %v66, %v234
    %v236 = vpop.f32.mrb[0].mxu0
    %v237 = vpop.f32.mrb[0].mxu0
    %v238 = vadd.f32 %v66, %v237
    %v239 = vpop.f32.mrb[0].mxu0
    %240 = vmatprep.mubr.bf16.mxu0 0
    %241 = vmatmul.mubr.bf16.gmra.mrb[0].mxu0 %v106
    %v242 = vpop.f32.mrb[0].mxu0
    %v243 = vadd.f32 %v66, %v242
    %v244 = vpop.f32.mrb[0].mxu0
    %v245 = vpop.f32.mrb[0].mxu0
    %v246 = vpop.f32.mrb[0].mxu0
    %247 = vdwg.mxu0
    %v248 = vmax.f32 %v147, 0.0
    %v249 = vmax.f32 %v150, 0.0
    %v250 = vmax.f32 %v155, 0.0
    %v251 = vmax.f32 %v158, 0.0
    %v252 = vmax.f32 %v163, 0.0
    %v253 = vmax.f32 %v166, 0.0
    %v254 = vmax.f32 %v171, 0.0
    %v255 = vmax.f32 %v174, 0.0
    %v256 = vmax.f32 %v179, 0.0
    %v257 = vmax.f32 %v182, 0.0
    %v258 = vmax.f32 %v187, 0.0
    %v259 = vmax.f32 %v190, 0.0
    %v260 = vmax.f32 %v195, 0.0
    %v261 = vmax.f32 %v198, 0.0
    %v262 = vmax.f32 %v203, 0.0
    %v263 = vmax.f32 %v206, 0.0
    %v264 = vmax.f32 %v211, 0.0
    %v265 = vmax.f32 %v214, 0.0
    %v266 = vmax.f32 %v219, 0.0
    %v267 = vmax.f32 %v222, 0.0
    %v268 = vmax.f32 %v227, 0.0
    %v269 = vmax.f32 %v230, 0.0
    %v270 = vmax.f32 %v235, 0.0
    %v271 = vmax.f32 %v238, 0.0
    %v272 = vmax.f32 %v243, 0.0
    %v273 = vpack.c.bf16 %v249, %v248
    %v274 = vpack.c.bf16 %v251, %v250
    %v275 = vpack.c.bf16 %v253, %v252
    %v276 = vpack.c.bf16 %v255, %v254
    %v277 = vpack.c.bf16 %v257, %v256
    %v278 = vpack.c.bf16 %v259, %v258
    %v279 = vpack.c.bf16 %v261, %v260
    %v280 = vpack.c.bf16 %v263, %v262
    %v281 = vpack.c.bf16 %v265, %v264
    %v282 = vpack.c.bf16 %v267, %v266
    %v283 = vpack.c.bf16 %v269, %v268
    %v284 = vpack.c.bf16 %v271, %v270
    %v285 = vpack.c.bf16 %v272, %v272
    %v286 = vld [vmem:[%s3] sm:$0xf]
    %v287 = vld [vmem:[%s3 + $0x4] sm:$0xf]
    %v288 = vld [vmem:[%s3 + $0x8] sm:$0xf]
    %v289 = vld [vmem:[%s3 + $0xc] sm:$0xf]
    %v290 = vld [vmem:[%s3 + $0x10] sm:$0xf]
    %v291 = vld [vmem:[%s3 + $0x14] sm:$0xf]
    %v292 = vld [vmem:[%s3 + $0x18] sm:$0xf]
    %v293 = vld [vmem:[%s3 + $0x1c] sm:$0xf]
    %v294 = vld [vmem:[%s4] sm:$0x1]
    %v296 = vlaneseq
    %v297 = vshrl.u32 %v296, 7
    %v298 = vsub.s32 0, %v297
    %v299 = vrot.slane %v294, %v298
    %v309 = vunpack.c.l.b16 %v286
    %v310 = vunpack.c.l.b16 %v287
    %v311 = vunpack.c.l.b16 %v288
    %v312 = vunpack.c.l.b16 %v289
    %v313 = vunpack.c.l.b16 %v290
    %v314 = vunpack.c.l.b16 %v291
    %v315 = vunpack.c.l.b16 %v292
    %v316 = vunpack.c.l.b16 %v293
    %v317 = vpack.c.b16 %v310, %v309
    %v318 = vpack.c.b16 %v312, %v311
    %v319 = vpack.c.b16 %v314, %v313
    %v320 = vpack.c.b16 %v316, %v315
    %vm325 = vcmask 523264
    %v327 = vsel %vm325, %v273, 0
    %v330 = vsel %vm325, %v274, 0
    %v333 = vsel %vm325, %v275, 0
    %v336 = vsel %vm325, %v276, 0
    %v339 = vsel %vm325, %v277, 0
    %v342 = vsel %vm325, %v278, 0
    %v345 = vsel %vm325, %v279, 0
    %v348 = vsel %vm325, %v280, 0
    %v351 = vsel %vm325, %v281, 0
    %v354 = vsel %vm325, %v282, 0
    %v357 = vsel %vm325, %v283, 0
    %v360 = vsel %vm325, %v284, 0
    %v363 = vsel %vm325, %v285, 0
    %365 = vmatprep.subr.bf16.mxu0 0
    %366 = vmatpush1.bf16.msra.mxu0 %v317
    %367 = vmatprep.subr.bf16.mxu0 0
    %368 = vmatpush1.bf16.msra.mxu0 %v318
    %369 = vmatprep.subr.bf16.mxu0 0
    %370 = vmatpush1.bf16.msra.mxu0 %v319
    %371 = vmatprep.subr.bf16.mxu0 0
    %372 = vmatpush1.bf16.msra.mxu0 %v320
    %373 = vmatprep.subr.bf16.mxu0 0
    %374 = vmatpush1.bf16.msra.mxu0 0
    %375 = vmatprep.subr.bf16.mxu0 0
    %376 = vmatpush1.bf16.msra.mxu0 0
    %377 = vmatprep.subr.bf16.mxu0 0
    %378 = vmatpush1.bf16.msra.mxu0 0
    %379 = vmatprep.subr.bf16.mxu0 0
    %380 = vmatpush1.bf16.msra.mxu0 0
    %381 = vmatprep.subr.bf16.mxu0 0
    %382 = vmatpush1.bf16.msra.mxu0 0
    %383 = vmatprep.subr.bf16.mxu0 0
    %384 = vmatpush1.bf16.msra.mxu0 0
    %385 = vmatprep.subr.bf16.mxu0 0
    %386 = vmatpush1.bf16.msra.mxu0 0
    %387 = vmatprep.subr.bf16.mxu0 0
    %388 = vmatpush1.bf16.msra.mxu0 0
    %389 = vmatprep.subr.bf16.mxu0 0
    %390 = vmatpush1.bf16.msra.mxu0 0
    %391 = vmatprep.subr.bf16.mxu0 0
    %392 = vmatpush1.bf16.msra.mxu0 0
    %393 = vmatprep.subr.bf16.mxu0 0
    %394 = vmatpush1.bf16.msra.mxu0 0
    %395 = vmatprep.subr.bf16.mxu0 0
    %396 = vmatpush1.bf16.msra.mxu0 0
    %397 = vmatprep.mubr.bf16.mxu0 0
    %398 = vmatmul.mubr.bf16.gmra.mrb[0].mxu0 %v327
    %v399 = vpop.f32.mrb[0].mxu0
    %v400 = vadd.f32 %v299, %v399
    %v401 = vpop.f32.mrb[0].mxu0
    %v402 = vpop.f32.mrb[0].mxu0
    %v403 = vadd.f32 %v299, %v402
    %v404 = vpop.f32.mrb[0].mxu0
    %405 = vmatprep.mubr.bf16.mxu0 0
    %406 = vmatmul.mubr.bf16.gmra.mrb[0].mxu0 %v330
    %v407 = vpop.f32.mrb[0].mxu0
    %v408 = vadd.f32 %v299, %v407
    %v409 = vpop.f32.mrb[0].mxu0
    %v410 = vpop.f32.mrb[0].mxu0
    %v411 = vadd.f32 %v299, %v410
    %v412 = vpop.f32.mrb[0].mxu0
    %413 = vmatprep.mubr.bf16.mxu0 0
    %414 = vmatmul.mubr.bf16.gmra.mrb[0].mxu0 %v333
    %v415 = vpop.f32.mrb[0].mxu0
    %v416 = vadd.f32 %v299, %v415
    %v417 = vpop.f32.mrb[0].mxu0
    %v418 = vpop.f32.mrb[0].mxu0
    %v419 = vadd.f32 %v299, %v418
    %v420 = vpop.f32.mrb[0].mxu0
    %421 = vmatprep.mubr.bf16.mxu0 0
    %422 = vmatmul.mubr.bf16.gmra.mrb[0].mxu0 %v336
    %v423 = vpop.f32.mrb[0].mxu0
    %v424 = vadd.f32 %v299, %v423
    %v425 = vpop.f32.mrb[0].mxu0
    %v426 = vpop.f32.mrb[0].mxu0
    %v427 = vadd.f32 %v299, %v426
    %v428 = vpop.f32.mrb[0].mxu0
    %429 = vmatprep.mubr.bf16.mxu0 0
    %430 = vmatmul.mubr.bf16.gmra.mrb[0].mxu0 %v339
    %v431 = vpop.f32.mrb[0].mxu0
    %v432 = vadd.f32 %v299, %v431
    %v433 = vpop.f32.mrb[0].mxu0
    %v434 = vpop.f32.mrb[0].mxu0
    %v435 = vadd.f32 %v299, %v434
    %v436 = vpop.f32.mrb[0].mxu0
    %437 = vmatprep.mubr.bf16.mxu0 0
    %438 = vmatmul.mubr.bf16.gmra.mrb[0].mxu0 %v342
    %v439 = vpop.f32.mrb[0].mxu0
    %v440 = vadd.f32 %v299, %v439
    %v441 = vpop.f32.mrb[0].mxu0
    %v442 = vpop.f32.mrb[0].mxu0
    %v443 = vadd.f32 %v299, %v442
    %v444 = vpop.f32.mrb[0].mxu0
    %445 = vmatprep.mubr.bf16.mxu0 0
    %446 = vmatmul.mubr.bf16.gmra.mrb[0].mxu0 %v345
    %v447 = vpop.f32.mrb[0].mxu0
    %v448 = vadd.f32 %v299, %v447
    %v449 = vpop.f32.mrb[0].mxu0
    %v450 = vpop.f32.mrb[0].mxu0
    %v451 = vadd.f32 %v299, %v450
    %v452 = vpop.f32.mrb[0].mxu0
    %453 = vmatprep.mubr.bf16.mxu0 0
    %454 = vmatmul.mubr.bf16.gmra.mrb[0].mxu0 %v348
    %v455 = vpop.f32.mrb[0].mxu0
    %v456 = vadd.f32 %v299, %v455
    %v457 = vpop.f32.mrb[0].mxu0
    %v458 = vpop.f32.mrb[0].mxu0
    %v459 = vadd.f32 %v299, %v458
    %v460 = vpop.f32.mrb[0].mxu0
    %461 = vmatprep.mubr.bf16.mxu0 0
    %462 = vmatmul.mubr.bf16.gmra.mrb[0].mxu0 %v351
    %v463 = vpop.f32.mrb[0].mxu0
    %v464 = vadd.f32 %v299, %v463
    %v465 = vpop.f32.mrb[0].mxu0
    %v466 = vpop.f32.mrb[0].mxu0
    %v467 = vadd.f32 %v299, %v466
    %v468 = vpop.f32.mrb[0].mxu0
    %469 = vmatprep.mubr.bf16.mxu0 0
    %470 = vmatmul.mubr.bf16.gmra.mrb[0].mxu0 %v354
    %v471 = vpop.f32.mrb[0].mxu0
    %v472 = vadd.f32 %v299, %v471
    %v473 = vpop.f32.mrb[0].mxu0
    %v474 = vpop.f32.mrb[0].mxu0
    %v475 = vadd.f32 %v299, %v474
    %v476 = vpop.f32.mrb[0].mxu0
    %477 = vmatprep.mubr.bf16.mxu0 0
    %478 = vmatmul.mubr.bf16.gmra.mrb[0].mxu0 %v357
    %v479 = vpop.f32.mrb[0].mxu0
    %v480 = vadd.f32 %v299, %v479
    %v481 = vpop.f32.mrb[0].mxu0
    %v482 = vpop.f32.mrb[0].mxu0
    %v483 = vadd.f32 %v299, %v482
    %v484 = vpop.f32.mrb[0].mxu0
    %485 = vmatprep.mubr.bf16.mxu0 0
    %486 = vmatmul.mubr.bf16.gmra.mrb[0].mxu0 %v360
    %v487 = vpop.f32.mrb[0].mxu0
    %v488 = vadd.f32 %v299, %v487
    %v489 = vpop.f32.mrb[0].mxu0
    %v490 = vpop.f32.mrb[0].mxu0
    %v491 = vadd.f32 %v299, %v490
    %v492 = vpop.f32.mrb[0].mxu0
    %493 = vmatprep.mubr.bf16.mxu0 0
    %494 = vmatmul.mubr.bf16.gmra.mrb[0].mxu0 %v363
    %v495 = vpop.f32.mrb[0].mxu0
    %v496 = vadd.f32 %v299, %v495
    %v497 = vpop.f32.mrb[0].mxu0
    %v498 = vpop.f32.mrb[0].mxu0
    %v499 = vpop.f32.mrb[0].mxu0
    %500 = vdwg.mxu0
    %501 = vmax.xlane.f32.xlu0 %v400
    %v502 = vpop.xlane.xlu0 %501
    %503 = vmax.xlane.f32.xlu0 %v403
    %v504 = vpop.xlane.xlu0 %503
    %505 = vmax.xlane.f32.xlu0 %v408
    %v506 = vpop.xlane.xlu0 %505
    %507 = vmax.xlane.f32.xlu0 %v411
    %v508 = vpop.xlane.xlu0 %507
    %509 = vmax.xlane.f32.xlu0 %v416
    %v510 = vpop.xlane.xlu0 %509
    %511 = vmax.xlane.f32.xlu0 %v419
    %v512 = vpop.xlane.xlu0 %511
    %513 = vmax.xlane.f32.xlu0 %v424
    %v514 = vpop.xlane.xlu0 %513
    %515 = vmax.xlane.f32.xlu0 %v427
    %v516 = vpop.xlane.xlu0 %515
    %517 = vmax.xlane.f32.xlu0 %v432
    %v518 = vpop.xlane.xlu0 %517
    %519 = vmax.xlane.f32.xlu0 %v435
    %v520 = vpop.xlane.xlu0 %519
    %521 = vmax.xlane.f32.xlu0 %v440
    %v522 = vpop.xlane.xlu0 %521
    %523 = vmax.xlane.f32.xlu0 %v443
    %v524 = vpop.xlane.xlu0 %523
    %525 = vmax.xlane.f32.xlu0 %v448
    %v526 = vpop.xlane.xlu0 %525
    %527 = vmax.xlane.f32.xlu0 %v451
    %v528 = vpop.xlane.xlu0 %527
    %529 = vmax.xlane.f32.xlu0 %v456
    %v530 = vpop.xlane.xlu0 %529
    %531 = vmax.xlane.f32.xlu0 %v459
    %v532 = vpop.xlane.xlu0 %531
    %533 = vmax.xlane.f32.xlu0 %v464
    %v534 = vpop.xlane.xlu0 %533
    %535 = vmax.xlane.f32.xlu0 %v467
    %v536 = vpop.xlane.xlu0 %535
    %537 = vmax.xlane.f32.xlu0 %v472
    %v538 = vpop.xlane.xlu0 %537
    %539 = vmax.xlane.f32.xlu0 %v475
    %v540 = vpop.xlane.xlu0 %539
    %541 = vmax.xlane.f32.xlu0 %v480
    %v542 = vpop.xlane.xlu0 %541
    %543 = vmax.xlane.f32.xlu0 %v483
    %v544 = vpop.xlane.xlu0 %543
    %545 = vmax.xlane.f32.xlu0 %v488
    %v546 = vpop.xlane.xlu0 %545
    %547 = vmax.xlane.f32.xlu0 %v491
    %v548 = vpop.xlane.xlu0 %547
    %549 = vmax.xlane.f32.xlu0 %v496
    %v550 = vpop.xlane.xlu0 %549
    %v551 = vsub.f32 %v400, %v502
    %v552 = vsub.f32 %v403, %v504
    %v553 = vsub.f32 %v408, %v506
    %v554 = vsub.f32 %v411, %v508
    %v555 = vsub.f32 %v416, %v510
    %v556 = vsub.f32 %v419, %v512
    %v557 = vsub.f32 %v424, %v514
    %v558 = vsub.f32 %v427, %v516
    %v559 = vsub.f32 %v432, %v518
    %v560 = vsub.f32 %v435, %v520
    %v561 = vsub.f32 %v440, %v522
    %v562 = vsub.f32 %v443, %v524
    %v563 = vsub.f32 %v448, %v526
    %v564 = vsub.f32 %v451, %v528
    %v565 = vsub.f32 %v456, %v530
    %v566 = vsub.f32 %v459, %v532
    %v567 = vsub.f32 %v464, %v534
    %v568 = vsub.f32 %v467, %v536
    %v569 = vsub.f32 %v472, %v538
    %v570 = vsub.f32 %v475, %v540
    %v571 = vsub.f32 %v480, %v542
    %v572 = vsub.f32 %v483, %v544
    %v573 = vsub.f32 %v488, %v546
    %v574 = vsub.f32 %v491, %v548
    %v575 = vsub.f32 %v496, %v550
    %v576 = vmul.f32 %v551, 1.442695
    %v577 = vpow.pop %v576
    %v578 = vmul.f32 %v552, 1.442695
    %v579 = vpow.pop %v578
    %v580 = vmul.f32 %v553, 1.442695
    %v581 = vpow.pop %v580
    %v582 = vmul.f32 %v554, 1.442695
    %v583 = vpow.pop %v582
    %v584 = vmul.f32 %v555, 1.442695
    %v585 = vpow.pop %v584
    %v586 = vmul.f32 %v556, 1.442695
    %v587 = vpow.pop %v586
    %v588 = vmul.f32 %v557, 1.442695
    %v589 = vpow.pop %v588
    %v590 = vmul.f32 %v558, 1.442695
    %v591 = vpow.pop %v590
    %v592 = vmul.f32 %v559, 1.442695
    %v593 = vpow.pop %v592
    %v594 = vmul.f32 %v560, 1.442695
    %v595 = vpow.pop %v594
    %v596 = vmul.f32 %v561, 1.442695
    %v597 = vpow.pop %v596
    %v598 = vmul.f32 %v562, 1.442695
    %v599 = vpow.pop %v598
    %v600 = vmul.f32 %v563, 1.442695
    %v601 = vpow.pop %v600
    %v602 = vmul.f32 %v564, 1.442695
    %v603 = vpow.pop %v602
    %v604 = vmul.f32 %v565, 1.442695
    %v605 = vpow.pop %v604
    %v606 = vmul.f32 %v566, 1.442695
    %v607 = vpow.pop %v606
    %v608 = vmul.f32 %v567, 1.442695
    %v609 = vpow.pop %v608
    %v610 = vmul.f32 %v568, 1.442695
    %v611 = vpow.pop %v610
    %v612 = vmul.f32 %v569, 1.442695
    %v613 = vpow.pop %v612
    %v614 = vmul.f32 %v570, 1.442695
    %v615 = vpow.pop %v614
    %v616 = vmul.f32 %v571, 1.442695
    %v617 = vpow.pop %v616
    %v618 = vmul.f32 %v572, 1.442695
    %v619 = vpow.pop %v618
    %v620 = vmul.f32 %v573, 1.442695
    %v621 = vpow.pop %v620
    %v622 = vmul.f32 %v574, 1.442695
    %v623 = vpow.pop %v622
    %v624 = vmul.f32 %v575, 1.442695
    %v625 = vpow.pop %v624
    %626 = vadd.xlane.f32.xlu0 %v577
    %v627 = vpop.xlane.xlu0 %626
    %628 = vadd.xlane.f32.xlu0 %v579
    %v629 = vpop.xlane.xlu0 %628
    %630 = vadd.xlane.f32.xlu0 %v581
    %v631 = vpop.xlane.xlu0 %630
    %632 = vadd.xlane.f32.xlu0 %v583
    %v633 = vpop.xlane.xlu0 %632
    %634 = vadd.xlane.f32.xlu0 %v585
    %v635 = vpop.xlane.xlu0 %634
    %636 = vadd.xlane.f32.xlu0 %v587
    %v637 = vpop.xlane.xlu0 %636
    %638 = vadd.xlane.f32.xlu0 %v589
    %v639 = vpop.xlane.xlu0 %638
    %640 = vadd.xlane.f32.xlu0 %v591
    %v641 = vpop.xlane.xlu0 %640
    %642 = vadd.xlane.f32.xlu0 %v593
    %v643 = vpop.xlane.xlu0 %642
    %644 = vadd.xlane.f32.xlu0 %v595
    %v645 = vpop.xlane.xlu0 %644
    %646 = vadd.xlane.f32.xlu0 %v597
    %v647 = vpop.xlane.xlu0 %646
    %648 = vadd.xlane.f32.xlu0 %v599
    %v649 = vpop.xlane.xlu0 %648
    %650 = vadd.xlane.f32.xlu0 %v601
    %v651 = vpop.xlane.xlu0 %650
    %652 = vadd.xlane.f32.xlu0 %v603
    %v653 = vpop.xlane.xlu0 %652
    %654 = vadd.xlane.f32.xlu0 %v605
    %v655 = vpop.xlane.xlu0 %654
    %656 = vadd.xlane.f32.xlu0 %v607
    %v657 = vpop.xlane.xlu0 %656
    %658 = vadd.xlane.f32.xlu0 %v609
    %v659 = vpop.xlane.xlu0 %658
    %660 = vadd.xlane.f32.xlu0 %v611
    %v661 = vpop.xlane.xlu0 %660
    %662 = vadd.xlane.f32.xlu0 %v613
    %v663 = vpop.xlane.xlu0 %662
    %664 = vadd.xlane.f32.xlu0 %v615
    %v665 = vpop.xlane.xlu0 %664
    %666 = vadd.xlane.f32.xlu0 %v617
    %v667 = vpop.xlane.xlu0 %666
    %668 = vadd.xlane.f32.xlu0 %v619
    %v669 = vpop.xlane.xlu0 %668
    %670 = vadd.xlane.f32.xlu0 %v621
    %v671 = vpop.xlane.xlu0 %670
    %672 = vadd.xlane.f32.xlu0 %v623
    %v673 = vpop.xlane.xlu0 %672
    %674 = vadd.xlane.f32.xlu0 %v625
    %v675 = vpop.xlane.xlu0 %674
    %v676 = vrcp.pop %v627
    %v677 = vmul.f32 %v577, %v676
    %v678 = vrcp.pop %v629
    %v679 = vmul.f32 %v579, %v678
    %v680 = vrcp.pop %v631
    %v681 = vmul.f32 %v581, %v680
    %v682 = vrcp.pop %v633
    %v683 = vmul.f32 %v583, %v682
    %v684 = vrcp.pop %v635
    %v685 = vmul.f32 %v585, %v684
    %v686 = vrcp.pop %v637
    %v687 = vmul.f32 %v587, %v686
    %v688 = vrcp.pop %v639
    %v689 = vmul.f32 %v589, %v688
    %v690 = vrcp.pop %v641
    %v691 = vmul.f32 %v591, %v690
    %v692 = vrcp.pop %v643
    %v693 = vmul.f32 %v593, %v692
    %v694 = vrcp.pop %v645
    %v695 = vmul.f32 %v595, %v694
    %v696 = vrcp.pop %v647
    %v697 = vmul.f32 %v597, %v696
    %v698 = vrcp.pop %v649
    %v699 = vmul.f32 %v599, %v698
    %v700 = vrcp.pop %v651
    %v701 = vmul.f32 %v601, %v700
    %v702 = vrcp.pop %v653
    %v703 = vmul.f32 %v603, %v702
    %v704 = vrcp.pop %v655
    %v705 = vmul.f32 %v605, %v704
    %v706 = vrcp.pop %v657
    %v707 = vmul.f32 %v607, %v706
    %v708 = vrcp.pop %v659
    %v709 = vmul.f32 %v609, %v708
    %v710 = vrcp.pop %v661
    %v711 = vmul.f32 %v611, %v710
    %v712 = vrcp.pop %v663
    %v713 = vmul.f32 %v613, %v712
    %v714 = vrcp.pop %v665
    %v715 = vmul.f32 %v615, %v714
    %v716 = vrcp.pop %v667
    %v717 = vmul.f32 %v617, %v716
    %v718 = vrcp.pop %v669
    %v719 = vmul.f32 %v619, %v718
    %v720 = vrcp.pop %v671
    %v721 = vmul.f32 %v621, %v720
    %v722 = vrcp.pop %v673
    %v723 = vmul.f32 %v623, %v722
    %v724 = vrcp.pop %v675
    %v725 = vmul.f32 %v625, %v724
    %726 = vst [vmem:[#allocation2] sm:$0xff] %v677
    %727 = vst [vmem:[#allocation2 + $0x8] sm:$0xff] %v679
    %728 = vst [vmem:[#allocation2 + $0x10] sm:$0xff] %v681
    %729 = vst [vmem:[#allocation2 + $0x18] sm:$0xff] %v683
    %730 = vst [vmem:[#allocation2 + $0x20] sm:$0xff] %v685
    %731 = vst [vmem:[#allocation2 + $0x28] sm:$0xff] %v687
    %732 = vst [vmem:[#allocation2 + $0x30] sm:$0xff] %v689
    %733 = vst [vmem:[#allocation2 + $0x38] sm:$0xff] %v691
    %734 = vst [vmem:[#allocation2 + $0x40] sm:$0xff] %v693
    %735 = vst [vmem:[#allocation2 + $0x48] sm:$0xff] %v695
    %736 = vst [vmem:[#allocation2 + $0x50] sm:$0xff] %v697
    %737 = vst [vmem:[#allocation2 + $0x58] sm:$0xff] %v699
    %738 = vst [vmem:[#allocation2 + $0x60] sm:$0xff] %v701
    %739 = vst [vmem:[#allocation2 + $0x68] sm:$0xff] %v703
    %740 = vst [vmem:[#allocation2 + $0x70] sm:$0xff] %v705
    %741 = vst [vmem:[#allocation2 + $0x78] sm:$0xff] %v707
    %742 = vst [vmem:[#allocation2 + $0x80] sm:$0xff] %v709
    %743 = vst [vmem:[#allocation2 + $0x88] sm:$0xff] %v711
    %744 = vst [vmem:[#allocation2 + $0x90] sm:$0xff] %v713
    %745 = vst [vmem:[#allocation2 + $0x98] sm:$0xff] %v715
    %746 = vst [vmem:[#allocation2 + $0xa0] sm:$0xff] %v717
    %747 = vst [vmem:[#allocation2 + $0xa8] sm:$0xff] %v719
    %748 = vst [vmem:[#allocation2 + $0xb0] sm:$0xff] %v721
    %749 = vst [vmem:[#allocation2 + $0xb8] sm:$0xff] %v723
    %750 = vst [vmem:[#allocation2 + $0xc0] sm:$0xff] %v725
    // Predicated region
    $region22: #{policy_network_probs_padded.1} parent=1 // pred_check
      _
    $region23: #{policy_network_probs_padded.1} parent=1 // pred_check_branch
      %752 = sbr.rel (0) target = $region25
    $region24: #{policy_network_probs_padded.1} parent=1 // pred_region
      %s754 = ssub.s32 3200, 3200
      %755 = vsyncadd [#allocation3], %s754
      %s756 = sshll.u32 [#allocation2], 4
      %s757 = int_to_ptr.vmem [resolvable:$true] %s756
      %762 = dma.vmem_to_hbm [thread:$0]  %s757, 3200, %s5, [#allocation3], 128, 128, 8
    $region25: #{policy_network_probs_padded.1} parent=1 // pred_fallthru
      _
    // Predicated region
    $region26: #{policy_network_probs_padded.1} parent=1 // pred_check
      _
    $region27: #{policy_network_probs_padded.1} parent=1 // pred_check_branch
      %764 = sbr.rel (0) target = $region29
    $region28: #{policy_network_probs_padded.1} parent=1 // pred_region
      %765 = dma.done [#allocation3], 3200
    $region29: #{policy_network_probs_padded.1} parent=1 // pred_fallthru
      _
    %766 = vsyncpa [#allocation3], 1

</llo_original>
